<compile_context>
chip_gen: v7x
topology: tpu7x:2x2x1
jax: 0.10.0
libtpu: 0.0.40
codegen_flags: <defaults>
</compile_context>

<pallas_src>
import functools

import jax
import jax.numpy as jnp
from jax.experimental import pallas as pl
from jax.experimental.pallas import tpu as pltpu


def _cdiv(a, b):
    return (a + b - 1) // b


def _layernorm_kernel(x_ref, w_ref, b_ref, o_ref, *, eps, residual_weight,
                      has_bias, inv_d):
    # x_ref: (tile_rows, D), w_ref/b_ref: (1, D), o_ref: (tile_rows, D)
    xf = x_ref[...].astype(jnp.float32)

    # Two-pass (centered) statistics, accumulated in f32.
    mean = jnp.sum(xf, axis=-1, keepdims=True) * inv_d
    xc = xf - mean
    var = jnp.sum(xc * xc, axis=-1, keepdims=True) * inv_d
    inv = jax.lax.rsqrt(var + eps)

    w = w_ref[...].astype(jnp.float32)
    scale = (1.0 + w) if residual_weight else w

    y = xc * (inv * scale)
    if has_bias:
        y = y + b_ref[...].astype(jnp.float32)
    o_ref[...] = y.astype(o_ref.dtype)


def _sublane_multiple(dtype):
    """Sublane packing multiple for the I/O dtype (8 f32, 16 bf16, 32 int8/fp8)."""
    bits = jnp.dtype(dtype).itemsize * 8
    if bits >= 32:
        return 8
    if bits == 16:
        return 16
    return 32


def _vmem_capacity_bytes():
    """Physical VMEM of the current TensorCore; conservative fallback."""
    try:
        info = pltpu.get_tpu_info()
        cap = int(getattr(info, "vmem_capacity_bytes", 0))
        if cap > 0:
            return cap
    except Exception:
        pass
    return 64 << 20  # v7x-sized conservative default


def _choose_tile_rows(R, D, dtype_bytes, sub, vmem_capacity):
    """Largest sublane-aligned row tile whose double-buffered I/O + f32 temps fit."""
    # Per-row VMEM footprint of one pipelined grid step:
    #   2x input + 2x output tiles in the I/O dtype (double buffering)
    #   ~3 live f32 temporaries inside the kernel body (xf, xc, y).
    per_row = D * (4 * dtype_bytes + 3 * 4)
    budget = int(vmem_capacity * 0.70)  # headroom: weight bufs, compiler scratch
    rows = max(sub, (budget // max(per_row, 1)) // sub * sub)

    padded_r = _cdiv(R, sub) * sub
    rows = min(rows, padded_r)

    # Ensure >= 2 grid steps so the "parallel" axis can be sharded across the
    # two TensorCores on v7x (negligible cost on v5e/v6e).
    if rows >= padded_r and padded_r > sub:
        rows = max(sub, _cdiv(_cdiv(R, 2), sub) * sub)
    return int(rows)


def layer_norm(x, weight, bias=None, *, eps=1e-5, residual_weight=True,
               tile_rows=None):
    """LayerNorm over the last axis of x (any leading shape).

    Matches the PyTorch module:
        F.layer_norm(x, (D,), weight=(1 + weight) if residual_weight else weight,
                     bias=bias, eps=eps)
    """
    orig_shape = x.shape
    D = orig_shape[-1]
    x2 = x.reshape(-1, D)
    R = x2.shape[0]
    dtype_bytes = jnp.dtype(x.dtype).itemsize
    sub = _sublane_multiple(x.dtype)
    vmem_capacity = _vmem_capacity_bytes()

    if weight is None:
        # Module with weight=False: no learned scale.
        weight = jnp.ones((D,), dtype=jnp.float32)
        residual_weight = False

    has_bias = bias is not None
    if bias is None:
        bias = jnp.zeros((D,), dtype=jnp.float32)

    if tile_rows is None:
        tile_rows = _choose_tile_rows(R, D, dtype_bytes, sub, vmem_capacity)
    else:
        tile_rows = max(sub, (int(tile_rows) // sub) * sub)

    num_tiles = _cdiv(R, tile_rows)

    # Explicit scoped-VMEM limit: what this tiling actually needs, capped below
    # the physical capacity of the current generation.
    io_tile = tile_rows * D * dtype_bytes
    f32_tile = tile_rows * D * 4
    vmem_needed = 4 * io_tile + 3 * f32_tile + 8 * D * 4 + (2 << 20)
    vmem_limit = int(min(max(vmem_needed, 32 << 20), vmem_capacity - (8 << 20)))

    w2 = weight.reshape(1, D)
    b2 = bias.reshape(1, D)

    kernel = functools.partial(
        _layernorm_kernel,
        eps=float(eps),
        residual_weight=bool(residual_weight),
        has_bias=bool(has_bias),
        inv_d=float(1.0 / D),
    )

    cost = pl.CostEstimate(
        flops=10 * R * D,
        transcendentals=R,
        bytes_accessed=2 * R * D * dtype_bytes + 2 * D * 4,
    )

    out = pl.pallas_call(
        kernel,
        out_shape=jax.ShapeDtypeStruct((R, D), x.dtype),
        grid_spec=pltpu.PrefetchScalarGridSpec(
            num_scalar_prefetch=0,
            grid=(num_tiles,),
            in_specs=[
                pl.BlockSpec((tile_rows, D), lambda i: (i, 0)),
                pl.BlockSpec((1, D), lambda i: (0, 0)),
                pl.BlockSpec((1, D), lambda i: (0, 0)),
            ],
            out_specs=pl.BlockSpec((tile_rows, D), lambda i: (i, 0)),
        ),
        compiler_params=pltpu.CompilerParams(
            dimension_semantics=("parallel",),
            vmem_limit_bytes=vmem_limit,
        ),
        cost_estimate=cost,
    )(x2, w2, b2)

    return out.reshape(orig_shape)


def _reference(x, weight, bias, eps, residual_weight):
    xf = x.astype(jnp.float32)
    mean = jnp.mean(xf, axis=-1, keepdims=True)
    var = jnp.mean((xf - mean) ** 2, axis=-1, keepdims=True)
    scale = (1.0 + weight) if residual_weight else weight
    y = (xf - mean) * jax.lax.rsqrt(var + eps) * scale
    if bias is not None:
        y = y + bias
    return y.astype(x.dtype)


if __name__ == "__main__":
    key = jax.random.PRNGKey(0)
    B, S, D = 2, 8, 32

    x = jax.random.normal(key, (B, S, D), dtype=jnp.float32)

    # Deterministic parameter init mirroring LayerNorm.reset_parameters():
    # residual_weight=True -> weight zeros (scale = 1 + 0 = 1), bias=False.
    weight = jnp.zeros((D,), dtype=jnp.float32)

    y = layer_norm(x, weight, eps=1e-5, residual_weight=True)
    y = jax.block_until_ready(y)
    ref = _reference(x, weight, None, 1e-5, True)
    assert jnp.allclose(y, ref, atol=1e-5, rtol=1e-5), "mismatch vs reference"

    # Tail path: row count not a multiple of the tile (exercises cdiv + masked tail).
    x2 = jax.random.normal(jax.random.PRNGKey(1), (3, 5, D), dtype=jnp.float32)
    y2 = jax.block_until_ready(layer_norm(x2, weight, eps=1e-5, residual_weight=True))
    ref2 = _reference(x2, weight, None, 1e-5, True)
    assert jnp.allclose(y2, ref2, atol=1e-5, rtol=1e-5), "mismatch vs reference (tail)"

    # Bias path (module constructed with bias=True) + non-trivial weight.
    w3 = 0.1 * jax.random.normal(jax.random.PRNGKey(2), (D,), dtype=jnp.float32)
    b3 = 0.1 * jax.random.normal(jax.random.PRNGKey(3), (D,), dtype=jnp.float32)
    y3 = jax.block_until_ready(
        layer_norm(x, w3, b3, eps=1e-5, residual_weight=True))
    ref3 = _reference(x, w3, b3, 1e-5, True)
    assert jnp.allclose(y3, ref3, atol=1e-5, rtol=1e-5), "mismatch vs reference (bias)"

    print("KERNEL_OK")
</pallas_src>

<mosaic_0001>
module attributes {stable_mosaic.version = 11 : i64} {
  func.func @_layernorm_kernel(%arg0: i32, %arg1: memref<8x32xf32, #tpu.memory_space<vmem>>, %arg2: memref<1x32xf32, #tpu.memory_space<vmem>>, %arg3: memref<1x32xf32, #tpu.memory_space<vmem>>, %arg4: memref<8x32xf32, #tpu.memory_space<vmem>>) attributes {dimension_semantics = [#tpu.dimension_semantics<parallel>], iteration_bounds = array<i64: 2>, scalar_prefetch = 0 : i64, scratch_operands = 0 : i64, tpu.core_type = #tpu.core_type<tc>, window_params = [{transform_indices = @transform_0, window_bounds = array<i64: 8, 32>}, {pipeline_mode = #tpu.pipeline_mode<synchronous>, transform_indices = @transform_1, window_bounds = array<i64: 1, 32>}, {pipeline_mode = #tpu.pipeline_mode<synchronous>, transform_indices = @transform_2, window_bounds = array<i64: 1, 32>}, {transform_indices = @transform_3, window_bounds = array<i64: 8, 32>}]} {
    %c0 = arith.constant 0 : index
    %c0_0 = arith.constant 0 : index
    %0 = vector.load %arg1[%c0, %c0_0] : memref<8x32xf32, #tpu.memory_space<vmem>>, vector<8x32xf32>
    %cst = arith.constant dense<0.000000e+00> : vector<8xf32>
    %1 = vector.multi_reduction <add>, %0, %cst [1] : vector<8x32xf32> to vector<8xf32>
    %2 = vector.shape_cast %1 : vector<8xf32> to vector<8x1xf32>
    %cst_1 = arith.constant 3.125000e-02 : f32
    %3 = vector.broadcast %cst_1 : f32 to vector<8x1xf32>
    %4 = arith.mulf %2, %3 : vector<8x1xf32>
    %5 = vector.broadcast %4 : vector<8x1xf32> to vector<8x32xf32>
    %6 = arith.subf %0, %5 : vector<8x32xf32>
    %7 = arith.mulf %6, %6 : vector<8x32xf32>
    %cst_2 = arith.constant dense<0.000000e+00> : vector<8xf32>
    %8 = vector.multi_reduction <add>, %7, %cst_2 [1] : vector<8x32xf32> to vector<8xf32>
    %9 = vector.shape_cast %8 : vector<8xf32> to vector<8x1xf32>
    %cst_3 = arith.constant 3.125000e-02 : f32
    %10 = vector.broadcast %cst_3 : f32 to vector<8x1xf32>
    %11 = arith.mulf %9, %10 : vector<8x1xf32>
    %cst_4 = arith.constant 9.99999974E-6 : f32
    %12 = vector.broadcast %cst_4 : f32 to vector<8x1xf32>
    %13 = arith.addf %11, %12 : vector<8x1xf32>
    %14 = math.rsqrt %13 : vector<8x1xf32>
    %c0_5 = arith.constant 0 : index
    %c0_6 = arith.constant 0 : index
    %15 = vector.load %arg2[%c0_5, %c0_6] : memref<1x32xf32, #tpu.memory_space<vmem>>, vector<1x32xf32>
    %cst_7 = arith.constant 1.000000e+00 : f32
    %16 = vector.broadcast %cst_7 : f32 to vector<1x32xf32>
    %17 = arith.addf %16, %15 : vector<1x32xf32>
    %18 = vector.broadcast %14 : vector<8x1xf32> to vector<8x32xf32>
    %19 = vector.broadcast %17 : vector<1x32xf32> to vector<8x32xf32>
    %20 = arith.mulf %18, %19 : vector<8x32xf32>
    %21 = arith.mulf %6, %20 : vector<8x32xf32>
    %c0_8 = arith.constant 0 : index
    %c0_9 = arith.constant 0 : index
    %22 = vector.load %arg4[%c0_8, %c0_9] : memref<8x32xf32, #tpu.memory_space<vmem>>, vector<8x32xf32>
    tpu.vector_store %arg4[%c0_8, %c0_9], %21 {strides = array<i32>} : memref<8x32xf32, #tpu.memory_space<vmem>>, vector<8x32xf32>,
    return
  }
  func.func @transform_0(%arg0: i32) -> (i32, i32) {
    %c0_i32 = arith.constant 0 : i32
    %c0_i32_0 = arith.constant 0 : i32
    return %arg0, %c0_i32 : i32, i32
  }
  func.func @transform_1(%arg0: i32) -> (i32, i32) {
    %c0_i32 = arith.constant 0 : i32
    %c0_i32_0 = arith.constant 0 : i32
    %c0_i32_1 = arith.constant 0 : i32
    return %c0_i32, %c0_i32_0 : i32, i32
  }
  func.func @transform_2(%arg0: i32) -> (i32, i32) {
    %c0_i32 = arith.constant 0 : i32
    %c0_i32_0 = arith.constant 0 : i32
    %c0_i32_1 = arith.constant 0 : i32
    return %c0_i32, %c0_i32_0 : i32, i32
  }
  func.func @transform_3(%arg0: i32) -> (i32, i32) {
    %c0_i32 = arith.constant 0 : i32
    %c0_i32_0 = arith.constant 0 : i32
    return %arg0, %c0_i32 : i32, i32
  }
}

</mosaic_0001>

<llo_original>
// kernel: tpu_custom_call.1
$region0: #{tpu_custom_call.1}
  #allocation0 [shape = 'u32[]', space=smem, size = 0x4, offset = 0x4, fixed_abs, tag = 'smem constant byte address 0x4 - core index']
  #allocation1 [shape = 'u32[144,128]{1,0:T(1,128)}', space=vmem, size = 0x12000, scoped, tag = 'internal scratch']
  %s0 = inlined_call_operand.hbm [shape: f32[16,32], index: 0, kind: input, shape index: {}]
  %s1 = inlined_call_operand.vmem [shape: f32[1,32], index: 1, kind: input, shape index: {}]
  %s2 = inlined_call_operand.vmem [shape: f32[1,32], index: 2, kind: input, shape index: {}]
  %s3 = inlined_call_operand.hbm [shape: f32[16,32], index: 3, kind: output, shape index: {}]
  %s4 = sld [smem:[#allocation0]]
  $region49: #{tpu_custom_call.1} parent=0
    _
  %s6 = ssub.s32 1, %s4
  %s7 = scalar_select 0, %s6, %s4
  $region1: #{tpu_custom_call.1} parent=0
    #allocation2 [shape = 'u8[8192]{0}', space=vmem, size = 0x2000, scoped, tag = 'input window, operand 0']
    #allocation3 [shape = 's32[2]{0}', space=sflag, size = 0x8, scoped, tag = 'scoped memory for tpu_custom_call.1']
    #allocation4 [shape = 's32[2]{0}', space=sflag, size = 0x8, scoped, tag = 'scoped memory for tpu_custom_call.1']
    #allocation5 [shape = 'u8[8192]{0}', space=vmem, size = 0x2000, scoped, tag = 'output window, operand 0']
    %8 = vsyncpa [#allocation3], 0
    %s9 = scalar_lea.sflag [#allocation3], 1
    %10 = vsyncpa %s9, 0
    %11 = vsyncpa [#allocation4], 0
    %s12 = scalar_lea.sflag [#allocation4], 1
    %13 = vsyncpa %s12, 0
    loop: start=0, step=1, limit=4
    $region2: #{tpu_custom_call.1} parent=1 // loop_pre_header
      _
    $region3: #{tpu_custom_call.1} parent=1 // loop_header
      %s15 = sphi 0, %s19
      %p16 = scmp.ge.s32.totalorder %s15, 4
      %s25 = sphi 0, %s27
      %s28 = sphi 0, %s25
      %s29 = sphi 0, %s28
      %s45 = sphi 0, %s29
      %s49 = sphi 0, %s49
      %s51 = sphi 0, %s49
      %s52 = sphi 0, %s51
      %s66 = sphi 0, %s52
      %s70 = sphi 0, %s70
      %s72 = sphi 0, %s70
      %s73 = sphi 0, %s72
      %s87 = sphi 0, %s73
      %s93 = sphi 0, %s95
      %s96 = sphi 0, %s93
      %s97 = sphi 0, %s96
      %s113 = sphi 0, %s97
    $region4: #{tpu_custom_call.1} parent=1 // loop_header_branch
      %18 = sbr.rel (%p16) target = $region8
    $region5: #{tpu_custom_call.1} parent=1 // loop_body
      %s20 = ssub.s32 %s15, 1
      %s21 = ssub.s32 %s15, 2
      %s22 = sadd.s32 %s15, 1
      %s23 = ssub.s32 %s15, %s22
      %p24 = scmp.eq.s32.totalorder %s23, 0
      %s26 = sadd.s32 %s25, 1
      %s27 = scalar_select %p24, %s25, %s26
      %p30 = pneg %p24
      %p31 = scmp.eq.s32.totalorder %s15, 1
      %p32 = por %p30, %p31
      %p33 = scmp.ne.s32.totalorder %s25, %s28
      %p34 = scmp.eq.s32.totalorder %s15, 0
      %p35 = por %p33, %p34
      %p36 = scmp.ne.s32.totalorder %s25, %s28
      %p37 = scmp.eq.s32.totalorder %s20, 1
      %p38 = por %p36, %p37
      %p39 = scmp.ne.s32.totalorder %s28, %s29
      %p40 = scmp.eq.s32.totalorder %s20, 0
      %p41 = por %p39, %p40
      %p42 = scmp.ne.s32.totalorder %s28, %s29
      %p43 = scmp.eq.s32.totalorder %s21, 1
      %p44 = por %p42, %p43
      %p46 = scmp.ne.s32.totalorder %s29, %s45
      %p47 = scmp.eq.s32.totalorder %s21, 0
      %p48 = por %p46, %p47
      %s50 = sadd.s32 %s49, 1
      %p53 = scmp.eq.s32.totalorder %s15, 1
      %p54 = scmp.ne.s32.totalorder %s49, %s51
      %p55 = scmp.eq.s32.totalorder %s15, 0
      %p56 = por %p54, %p55
      %p57 = scmp.ne.s32.totalorder %s49, %s51
      %p58 = scmp.eq.s32.totalorder %s20, 1
      %p59 = por %p57, %p58
      %p60 = scmp.ne.s32.totalorder %s51, %s52
      %p61 = scmp.eq.s32.totalorder %s20, 0
      %p62 = por %p60, %p61
      %p63 = scmp.ne.s32.totalorder %s51, %s52
      %p64 = scmp.eq.s32.totalorder %s21, 1
      %p65 = por %p63, %p64
      %p67 = scmp.ne.s32.totalorder %s52, %s66
      %p68 = scmp.eq.s32.totalorder %s21, 0
      %p69 = por %p67, %p68
      %s71 = sadd.s32 %s70, 1
      %p74 = scmp.eq.s32.totalorder %s15, 1
      %p75 = scmp.ne.s32.totalorder %s70, %s72
      %p76 = scmp.eq.s32.totalorder %s15, 0
      %p77 = por %p75, %p76
      %p78 = scmp.ne.s32.totalorder %s70, %s72
      %p79 = scmp.eq.s32.totalorder %s20, 1
      %p80 = por %p78, %p79
      %p81 = scmp.ne.s32.totalorder %s72, %s73
      %p82 = scmp.eq.s32.totalorder %s20, 0
      %p83 = por %p81, %p82
      %p84 = scmp.ne.s32.totalorder %s72, %s73
      %p85 = scmp.eq.s32.totalorder %s21, 1
      %p86 = por %p84, %p85
      %p88 = scmp.ne.s32.totalorder %s73, %s87
      %p89 = scmp.eq.s32.totalorder %s21, 0
      %p90 = por %p88, %p89
      %s91 = ssub.s32 %s15, %s22
      %p92 = scmp.eq.s32.totalorder %s91, 0
      %s94 = sadd.s32 %s93, 1
      %s95 = scalar_select %p92, %s93, %s94
      %p98 = pneg %p92
      %p99 = scmp.eq.s32.totalorder %s15, 1
      %p100 = por %p98, %p99
      %p101 = scmp.ne.s32.totalorder %s93, %s96
      %p102 = scmp.eq.s32.totalorder %s15, 0
      %p103 = por %p101, %p102
      %p104 = scmp.ne.s32.totalorder %s93, %s96
      %p105 = scmp.eq.s32.totalorder %s20, 1
      %p106 = por %p104, %p105
      %p107 = scmp.ne.s32.totalorder %s96, %s97
      %p108 = scmp.eq.s32.totalorder %s20, 0
      %p109 = por %p107, %p108
      %p110 = scmp.ne.s32.totalorder %s96, %s97
      %p111 = scmp.eq.s32.totalorder %s21, 1
      %p112 = por %p110, %p111
      %p114 = scmp.ne.s32.totalorder %s97, %s113
      %p115 = scmp.eq.s32.totalorder %s21, 0
      %p116 = por %p114, %p115
      %p117 = scmp.le.s32.totalorder 1, %s15
      %p118 = scmp.lt.s32.totalorder %s15, 3
      %p119 = pnand %p117, %p118
      %p120 = pneg %p119
      // Predicated region
      $region9: #{tpu_custom_call.1} parent=5 // pred_check
        _
      $region10: #{tpu_custom_call.1} parent=5 // pred_check_branch
        %122 = sbr.rel (%p119) target = $region12
      $region11: #{tpu_custom_call.1} parent=5 // pred_region
        %s123 = ssub.s32 %s15, 1
        // Predicated region
        $region13: #{tpu_custom_call.1} parent=11 // pred_check
          %p124 = pneg %p62
        $region14: #{tpu_custom_call.1} parent=11 // pred_check_branch
          %126 = sbr.rel (%p124) target = $region16
        $region15: #{tpu_custom_call.1} parent=11 // pred_region
          _
        $region16: #{tpu_custom_call.1} parent=11 // pred_fallthru
          _
        // Predicated region
        $region17: #{tpu_custom_call.1} parent=11 // pred_check
          %p127 = pneg %p83
        $region18: #{tpu_custom_call.1} parent=11 // pred_check_branch
          %129 = sbr.rel (%p127) target = $region20
        $region19: #{tpu_custom_call.1} parent=11 // pred_region
          _
        $region20: #{tpu_custom_call.1} parent=11 // pred_fallthru
          _
      $region12: #{tpu_custom_call.1} parent=5 // pred_fallthru
        _
      %p130 = scmp.lt.s32.totalorder %s15, 2
      // Predicated region
      $region21: #{tpu_custom_call.1} parent=5 // pred_check
        %p131 = pneg %p130
      $region22: #{tpu_custom_call.1} parent=5 // pred_check_branch
        %133 = sbr.rel (%p131) target = $region24
      $region23: #{tpu_custom_call.1} parent=5 // pred_region
        // Predicated region
        $region25: #{tpu_custom_call.1} parent=23 // pred_check
          %p134 = pneg %p35
        $region26: #{tpu_custom_call.1} parent=23 // pred_check_branch
          %136 = sbr.rel (%p134) target = $region28
        $region27: #{tpu_custom_call.1} parent=23 // pred_region
          %s137 = sand.u32 %s25, 1
          %s138 = scalar_lea.sflag [#allocation3], %s137
          %s139 = sand.u32 %s25, 1
          %s140 = smul.addr %s139, 8
          %s141 = scalar_lea.vmem [#allocation2], %s140
          %s143 = ssub.s32 128, 128
          %144 = vsyncadd %s138, %s143
          %s145 = smul.addr %s15, 128
          %s146 = scalar_lea.hbm %s0, %s145
          %s148 = sshll.u32 %s141, 4
          %s149 = int_to_ptr.vmem [resolvable:$true] %s148
          %151 = dma.hbm_to_vmem [thread:$0]  %s146, 128, %s149, %s138
        $region28: #{tpu_custom_call.1} parent=23 // pred_fallthru
          _
      $region24: #{tpu_custom_call.1} parent=5 // pred_fallthru
        _
      %p152 = scmp.le.s32.totalorder 1, %s15
      %p153 = scmp.lt.s32.totalorder %s15, 3
      %p154 = pnand %p152, %p153
      %p155 = pneg %p154
      // Predicated region
      $region29: #{tpu_custom_call.1} parent=5 // pred_check
        _
      $region30: #{tpu_custom_call.1} parent=5 // pred_check_branch
        %157 = sbr.rel (%p154) target = $region32
      $region31: #{tpu_custom_call.1} parent=5 // pred_region
        %s158 = ssub.s32 %s15, 1
        %s159 = sand.u32 %s28, 1
        %s160 = scalar_lea.sflag [#allocation3], %s159
        %s161 = sand.u32 %s28, 1
        %s162 = smul.addr %s161, 8
        %s163 = scalar_lea.vmem [#allocation2], %s162
        // Predicated region
        $region33: #{tpu_custom_call.1} parent=31 // pred_check
          %p164 = pneg %p41
        $region34: #{tpu_custom_call.1} parent=31 // pred_check_branch
          %166 = sbr.rel (%p164) target = $region36
        $region35: #{tpu_custom_call.1} parent=31 // pred_region
          %167 = dma.done %s160, 128
        $region36: #{tpu_custom_call.1} parent=31 // pred_fallthru
          _
        %s168 = sand.u32 %s28, 1
        %s169 = scalar_lea.sflag [#allocation3], %s168
        %s170 = sand.u32 %s28, 1
        %s171 = smul.addr %s170, 8
        %s172 = scalar_lea.vmem [#allocation2], %s171
        %p173 = pneg %p41
        %p174 = pneg %p38
        %p175 = pneg %p62
        %p176 = pneg %p59
        %p177 = pneg %p83
        %p178 = pneg %p80
        %p179 = pneg %p109
        %p180 = pneg %p106
        %s181 = sand.u32 %s96, 1
        %s182 = scalar_lea.sflag [#allocation4], %s181
        %s183 = sand.u32 %s96, 1
        %s184 = smul.addr %s183, 8
        %s185 = scalar_lea.vmem [#allocation5], %s184
        %v186 = vld [vmem:[%s163] sm:$0xff]
        %vm187 = vcmask 261120
        %v188 = vsel %vm187, %v186, 0.0
        %189 = vadd.xlane.f32.xlu0 %v188
        %v190 = vpop.xlane.xlu0 %189
        %v191 = vmul.f32 %v190, 0.03125
        %v192 = vsub.f32 %v186, %v191
        %v193 = vmul.f32 %v192, %v192
        %v194 = vsel %vm187, %v193, 0.0
        %195 = vadd.xlane.f32.xlu0 %v194
        %v196 = vpop.xlane.xlu0 %195
        %v197 = vmul.f32 %v196, 0.03125
        %v198 = vadd.f32 %v197, 1e-05
        %v199 = vrsqrt.pop %v198
        %v200 = vld [vmem:[%s1] sm:$0x1]
        %v201 = vadd.f32 %v200, 1.0
        %v203 = vlaneseq
        %v204 = vshrl.u32 %v203, 7
        %v205 = vsub.s32 0, %v204
        %v206 = vrot.slane %v201, %v205
        %v208 = vmul.f32 %v199, %v206
        %v209 = vmul.f32 %v192, %v208
        %210 = vst.msk [vmem:[%s185] sm:$0xff] %vm187, %v209
        %s211 = sand.u32 %s96, 1
        %s212 = scalar_lea.sflag [#allocation4], %s211
        %s213 = sand.u32 %s96, 1
        %s214 = smul.addr %s213, 8
        %s215 = scalar_lea.vmem [#allocation5], %s214
        // Predicated region
        $region37: #{tpu_custom_call.1} parent=31 // pred_check
          %p216 = pneg %p106
        $region38: #{tpu_custom_call.1} parent=31 // pred_check_branch
          %218 = sbr.rel (%p216) target = $region40
        $region39: #{tpu_custom_call.1} parent=31 // pred_region
          %s220 = ssub.s32 128, 128
          %221 = vsyncadd %s212, %s220
          %s222 = smul.addr %s20, 128
          %s223 = scalar_lea.hbm %s3, %s222
          %s225 = sshll.u32 %s215, 4
          %s226 = int_to_ptr.vmem [resolvable:$true] %s225
          %228 = dma.vmem_to_hbm [thread:$0]  %s226, 128, %s223, %s212
        $region40: #{tpu_custom_call.1} parent=31 // pred_fallthru
          _
      $region32: #{tpu_custom_call.1} parent=5 // pred_fallthru
        _
      %p229 = scmp.le.s32.totalorder 2, %s15
      // Predicated region
      $region41: #{tpu_custom_call.1} parent=5 // pred_check
        %p230 = pneg %p229
      $region42: #{tpu_custom_call.1} parent=5 // pred_check_branch
        %232 = sbr.rel (%p230) target = $region44
      $region43: #{tpu_custom_call.1} parent=5 // pred_region
        %s233 = ssub.s32 %s15, 2
        // Predicated region
        $region45: #{tpu_custom_call.1} parent=43 // pred_check
          %p234 = pneg %p112
        $region46: #{tpu_custom_call.1} parent=43 // pred_check_branch
          %236 = sbr.rel (%p234) target = $region48
        $region47: #{tpu_custom_call.1} parent=43 // pred_region
          %s237 = sand.u32 %s97, 1
          %s238 = scalar_lea.sflag [#allocation4], %s237
          %s239 = sand.u32 %s97, 1
          %s240 = smul.addr %s239, 8
          %s241 = scalar_lea.vmem [#allocation5], %s240
          %242 = dma.done %s238, 128
        $region48: #{tpu_custom_call.1} parent=43 // pred_fallthru
          _
      $region44: #{tpu_custom_call.1} parent=5 // pred_fallthru
        _
    $region6: #{tpu_custom_call.1} parent=1 // loop_footer
      %s19 = sadd.s32 1, %s15
    $region7: #{tpu_custom_call.1} parent=1 // loop_footer_branch
      %14 = sbr.rel target = $region3
    $region8: #{tpu_custom_call.1} parent=1 // loop_exit
      _
    %243 = vsyncpa [#allocation3], 1
    %s244 = scalar_lea.sflag [#allocation3], 1
    %245 = vsyncpa %s244, 1
    %246 = vsyncpa [#allocation4], 1
    %s247 = scalar_lea.sflag [#allocation4], 1
    %248 = vsyncpa %s247, 1

</llo_original>
